<compile_context>
chip_gen: v5e
topology: v5e:2x2
jax: 0.10.0
libtpu: 0.0.40
codegen_flags: <defaults>
</compile_context>

<pallas_src>
from functools import partial

import jax
import jax.numpy as jnp
from jax.experimental import pallas as pl
from jax.experimental.pallas import tpu as pltpu


def _lambda_shortcut_kernel(x_ref, o_ref, *, C, pad):
    # x_ref: (1, TH, 1, Wo, 2*C) -- even-H rows only (index_map pins block 0 on
    #                               the H-pair axis); the 2*C lane dim packs the
    #                               (even-W, odd-W) channel pairs of each column.
    # o_ref: (1, TH, Wo, C + 2*pad)
    x = x_ref[...]                                   # single full-tile load
    xs = x[0, :, 0, :, :C]                           # (TH, Wo, C): even-W cols
    padded = jnp.pad(xs, ((0, 0), (0, 0), (pad, pad)))   # channel zero-pad
    o_ref[...] = padded[None].astype(o_ref.dtype)    # ONE full-width store


def _pick_th(Ho, Wo, C, c_out, itemsize, budget_bytes=2 * 1024 * 1024):
    """Largest divisor of Ho whose (input + output) block stays under budget."""
    best = 1
    for th in range(1, Ho + 1):
        if Ho % th:
            continue
        per_step = th * Wo * (2 * C + c_out) * itemsize
        if per_step <= budget_bytes:
            best = th
    return best


def lambda_layer(x_nchw):
    """Pallas implementation of LambdaLayer(lambda x: F.pad(x[:, :, ::2, ::2],
    (0,0,0,0,C//2,C//2), 'constant', 0)).  Input/output are NCHW."""
    B, C, H, W = x_nchw.shape
    assert H % 2 == 0 and W % 2 == 0, "spatial dims must be even for stride-2"
    pad = C // 2
    c_out = C + 2 * pad
    Ho, Wo = H // 2, W // 2

    # NCHW -> NHWC so channels ride the TPU lane dim; fold both stride-2
    # selections into a contiguous reshape (no strided access in the kernel).
    x_nhwc = jnp.transpose(x_nchw, (0, 2, 3, 1))          # (B, H, W, C)
    x_folded = x_nhwc.reshape(B, Ho, 2, Wo, 2 * C)        # (B, Ho, 2, Wo, 2C)

    TH = _pick_th(Ho, Wo, C, c_out, x_folded.dtype.itemsize)

    out_nhwc = pl.pallas_call(
        partial(_lambda_shortcut_kernel, C=C, pad=pad),
        out_shape=jax.ShapeDtypeStruct((B, Ho, Wo, c_out), x_nhwc.dtype),
        grid=(B, Ho // TH),
        in_specs=[
            # Block 0 on the size-2 H-pair axis => only even H rows are DMA'd.
            pl.BlockSpec((1, TH, 1, Wo, 2 * C), lambda b, hc: (b, hc, 0, 0, 0)),
        ],
        out_specs=pl.BlockSpec((1, TH, Wo, c_out), lambda b, hc: (b, hc, 0, 0)),
        compiler_params=pltpu.CompilerParams(
            dimension_semantics=("parallel", "parallel")),
    )(x_folded)

    return jnp.transpose(out_nhwc, (0, 3, 1, 2))          # NHWC -> NCHW (glue)


if __name__ == "__main__":
    key = jax.random.PRNGKey(0)
    # NCHW input, matching the PyTorch module's convention.
    x = jax.random.normal(key, (2, 4, 16, 16), dtype=jnp.float32)

    y = jax.block_until_ready(lambda_layer(x))

    # Pure-JAX reference of the same lambda for a correctness check.
    C = x.shape[1]
    ref = jnp.pad(x[:, :, ::2, ::2],
                  ((0, 0), (C // 2, C // 2), (0, 0), (0, 0)))

    assert y.shape == ref.shape, (y.shape, ref.shape)
    assert y.shape == (2, 8, 8, 8), y.shape
    assert y.dtype == x.dtype
    assert jnp.allclose(y, ref), "mismatch vs. reference"
    print("KERNEL_OK")
</pallas_src>

<mosaic_0001>
module attributes {stable_mosaic.version = 11 : i64} {
  func.func @_lambda_shortcut_kernel(%arg0: i32, %arg1: i32, %arg2: memref<1x8x1x8x8xf32, #tpu.memory_space<vmem>>, %arg3: memref<1x8x8x8xf32, #tpu.memory_space<vmem>>) attributes {dimension_semantics = [#tpu.dimension_semantics<parallel>, #tpu.dimension_semantics<parallel>], iteration_bounds = array<i64: 2, 1>, scalar_prefetch = 0 : i64, scratch_operands = 0 : i64, tpu.core_type = #tpu.core_type<tc>, window_params = [{transform_indices = @transform_0, window_bounds = array<i64: 1, 8, 1, 8, 8>}, {transform_indices = @transform_1, window_bounds = array<i64: 1, 8, 8, 8>}]} {
    %c0 = arith.constant 0 : index
    %c0_0 = arith.constant 0 : index
    %c0_1 = arith.constant 0 : index
    %c0_2 = arith.constant 0 : index
    %c0_3 = arith.constant 0 : index
    %0 = vector.load %arg2[%c0, %c0_0, %c0_1, %c0_2, %c0_3] : memref<1x8x1x8x8xf32, #tpu.memory_space<vmem>>, vector<1x8x1x8x8xf32>
    %1 = vector.extract_strided_slice %0 {offsets = [0, 0, 0, 0, 0], sizes = [1, 8, 1, 8, 4], strides = [1, 1, 1, 1, 1]} : vector<1x8x1x8x8xf32> to vector<1x8x1x8x4xf32>
    %2 = vector.shape_cast %1 : vector<1x8x1x8x4xf32> to vector<8x8x4xf32>
    %c0_i32 = arith.constant 0 : i32
    %3 = arith.sitofp %c0_i32 : i32 to f32
    %4 = vector.broadcast %3 : f32 to vector<8x8x2xf32>
    %5 = tpu.concatenate %4, %2 in 2 : vector<8x8x2xf32>, vector<8x8x4xf32> -> vector<8x8x6xf32>
    %6 = vector.broadcast %3 : f32 to vector<8x8x2xf32>
    %7 = tpu.concatenate %5, %6 in 2 : vector<8x8x6xf32>, vector<8x8x2xf32> -> vector<8x8x8xf32>
    %8 = vector.shape_cast %7 : vector<8x8x8xf32> to vector<1x8x8x8xf32>
    %c0_4 = arith.constant 0 : index
    %c0_5 = arith.constant 0 : index
    %c0_6 = arith.constant 0 : index
    %c0_7 = arith.constant 0 : index
    %9 = vector.load %arg3[%c0_4, %c0_5, %c0_6, %c0_7] : memref<1x8x8x8xf32, #tpu.memory_space<vmem>>, vector<1x8x8x8xf32>
    tpu.vector_store %arg3[%c0_4, %c0_5, %c0_6, %c0_7], %8 {strides = array<i32>} : memref<1x8x8x8xf32, #tpu.memory_space<vmem>>, vector<1x8x8x8xf32>,
    return
  }
  func.func @transform_0(%arg0: i32, %arg1: i32) -> (i32, i32, i32, i32, i32) {
    %c0_i32 = arith.constant 0 : i32
    %c0_i32_0 = arith.constant 0 : i32
    %c0_i32_1 = arith.constant 0 : i32
    %c0_i32_2 = arith.constant 0 : i32
    return %arg0, %arg1, %c0_i32, %c0_i32_0, %c0_i32_1 : i32, i32, i32, i32, i32
  }
  func.func @transform_1(%arg0: i32, %arg1: i32) -> (i32, i32, i32, i32) {
    %c0_i32 = arith.constant 0 : i32
    %c0_i32_0 = arith.constant 0 : i32
    %c0_i32_1 = arith.constant 0 : i32
    return %arg0, %arg1, %c0_i32, %c0_i32_0 : i32, i32, i32, i32
  }
}

</mosaic_0001>

<llo_original>
// kernel: tpu_custom_call.1
$region0: #{tpu_custom_call.1}
  #allocation0 [shape = 'u32[]', space=smem, size = 0x4, offset = 0x4, fixed_abs, tag = 'smem constant byte address 0x4 - core index']
  #allocation1 [shape = 'u32[72,128]{1,0:T(1,128)}', space=vmem, size = 0x9000, scoped, tag = 'internal scratch']
  %s0 = inlined_call_operand.hbm [shape: f32[2,8,2,8,8], index: 0, kind: input, shape index: {}]
  %s1 = inlined_call_operand.hbm [shape: f32[2,8,8,8], index: 1, kind: output, shape index: {}]
  %s2 = sld [smem:[#allocation0]]
  $region41: #{tpu_custom_call.1} parent=0
    _
  %s4 = ssub.s32 1, %s2
  %s5 = scalar_select 0, %s4, %s2
  $region1: #{tpu_custom_call.1} parent=0
    #allocation2 [shape = 'u8[65536]{0}', space=vmem, size = 0x10000, scoped, tag = 'input window, operand 0']
    #allocation3 [shape = 's32[2]{0}', space=sflag, size = 0x8, scoped, tag = 'scoped memory for tpu_custom_call.1']
    #allocation4 [shape = 's32[2]{0}', space=sflag, size = 0x8, scoped, tag = 'scoped memory for tpu_custom_call.1']
    #allocation5 [shape = 'u8[65536]{0}', space=vmem, size = 0x10000, scoped, tag = 'output window, operand 0']
    %6 = vsyncpa [#allocation3], 0
    %s7 = scalar_lea.sflag [#allocation3], 1
    %8 = vsyncpa %s7, 0
    %9 = vsyncpa [#allocation4], 0
    %s10 = scalar_lea.sflag [#allocation4], 1
    %11 = vsyncpa %s10, 0
    loop: start=0, step=1, limit=4
    $region2: #{tpu_custom_call.1} parent=1 // loop_pre_header
      _
    $region3: #{tpu_custom_call.1} parent=1 // loop_header
      %s13 = sphi 0, %s17
      %p14 = scmp.ge.s32.totalorder %s13, 4
      %s20 = sphi 0, %s32
      %s21 = sphi 0, %s28
      %s22 = sphi 0, %s20
      %s23 = sphi 0, %s21
      %s24 = sphi 0, %s22
      %s25 = sphi 0, %s23
      %s37 = sphi 0, %s39
      %s40 = sphi 0, %s37
      %s41 = sphi 0, %s40
      %s57 = sphi 0, %s41
      %s65 = sphi 0, %s67
      %s68 = sphi 0, %s65
      %s69 = sphi 0, %s68
      %s85 = sphi 0, %s69
    $region4: #{tpu_custom_call.1} parent=1 // loop_header_branch
      %16 = sbr.rel (%p14) target = $region8
    $region5: #{tpu_custom_call.1} parent=1 // loop_body
      %s18 = ssub.s32 %s13, 1
      %s19 = ssub.s32 %s13, 2
      %s26 = sadd.s32 1, %s21
      %p27 = scmp.ge.s32.totalorder %s26, 1
      %s28 = scalar_select %p27, 0, %s26
      %s29 = sadd.s32 1, %s20
      %s30 = scalar_select %p27, %s29, %s20
      %p31 = scmp.ge.s32.totalorder %s30, 2
      %s32 = scalar_select %p31, 0, %s30
      %s33 = ssub.s32 %s20, %s32
      %s34 = ssub.s32 %s21, %s28
      %s35 = sor.u32 %s33, %s34
      %p36 = scmp.eq.s32.totalorder %s35, 0
      %s38 = sadd.s32 %s37, 1
      %s39 = scalar_select %p36, %s37, %s38
      %p42 = pneg %p36
      %p43 = scmp.eq.s32.totalorder %s13, 1
      %p44 = por %p42, %p43
      %p45 = scmp.ne.s32.totalorder %s37, %s40
      %p46 = scmp.eq.s32.totalorder %s13, 0
      %p47 = por %p45, %p46
      %p48 = scmp.ne.s32.totalorder %s37, %s40
      %p49 = scmp.eq.s32.totalorder %s18, 1
      %p50 = por %p48, %p49
      %p51 = scmp.ne.s32.totalorder %s40, %s41
      %p52 = scmp.eq.s32.totalorder %s18, 0
      %p53 = por %p51, %p52
      %p54 = scmp.ne.s32.totalorder %s40, %s41
      %p55 = scmp.eq.s32.totalorder %s19, 1
      %p56 = por %p54, %p55
      %p58 = scmp.ne.s32.totalorder %s41, %s57
      %p59 = scmp.eq.s32.totalorder %s19, 0
      %p60 = por %p58, %p59
      %s61 = ssub.s32 %s20, %s32
      %s62 = ssub.s32 %s21, %s28
      %s63 = sor.u32 %s61, %s62
      %p64 = scmp.eq.s32.totalorder %s63, 0
      %s66 = sadd.s32 %s65, 1
      %s67 = scalar_select %p64, %s65, %s66
      %p70 = pneg %p64
      %p71 = scmp.eq.s32.totalorder %s13, 1
      %p72 = por %p70, %p71
      %p73 = scmp.ne.s32.totalorder %s65, %s68
      %p74 = scmp.eq.s32.totalorder %s13, 0
      %p75 = por %p73, %p74
      %p76 = scmp.ne.s32.totalorder %s65, %s68
      %p77 = scmp.eq.s32.totalorder %s18, 1
      %p78 = por %p76, %p77
      %p79 = scmp.ne.s32.totalorder %s68, %s69
      %p80 = scmp.eq.s32.totalorder %s18, 0
      %p81 = por %p79, %p80
      %p82 = scmp.ne.s32.totalorder %s68, %s69
      %p83 = scmp.eq.s32.totalorder %s19, 1
      %p84 = por %p82, %p83
      %p86 = scmp.ne.s32.totalorder %s69, %s85
      %p87 = scmp.eq.s32.totalorder %s19, 0
      %p88 = por %p86, %p87
      %p89 = scmp.le.s32.totalorder 1, %s13
      %p90 = scmp.lt.s32.totalorder %s13, 3
      %p91 = pnand %p89, %p90
      %p92 = pneg %p91
      // Predicated region
      $region9: #{tpu_custom_call.1} parent=5 // pred_check
        _
      $region10: #{tpu_custom_call.1} parent=5 // pred_check_branch
        %94 = sbr.rel (%p91) target = $region12
      $region11: #{tpu_custom_call.1} parent=5 // pred_region
        %s95 = ssub.s32 %s13, 1
      $region12: #{tpu_custom_call.1} parent=5 // pred_fallthru
        _
      %p96 = scmp.lt.s32.totalorder %s13, 2
      // Predicated region
      $region13: #{tpu_custom_call.1} parent=5 // pred_check
        %p97 = pneg %p96
      $region14: #{tpu_custom_call.1} parent=5 // pred_check_branch
        %99 = sbr.rel (%p97) target = $region16
      $region15: #{tpu_custom_call.1} parent=5 // pred_region
        // Predicated region
        $region17: #{tpu_custom_call.1} parent=15 // pred_check
          %p100 = pneg %p47
        $region18: #{tpu_custom_call.1} parent=15 // pred_check_branch
          %102 = sbr.rel (%p100) target = $region20
        $region19: #{tpu_custom_call.1} parent=15 // pred_region
          %s103 = sand.u32 %s37, 1
          %s104 = scalar_lea.sflag [#allocation3], %s103
          %s105 = sand.u32 %s37, 1
          %s106 = smul.addr %s105, 64
          %s107 = scalar_lea.vmem [#allocation2], %s106
          %s108 = smul.u32 8, %s21
          %110 = vsyncadd %s104, 0
          %s111 = smul.addr %s108, 2
          %s112 = smul.addr %s20, 16
          %s113 = sadd.s32 %s111, %s112
          %s114 = smul.addr %s113, 8
          %s115 = scalar_lea.hbm %s0, %s114
          %s116 = sshll.u32 %s115, 4
          %s117 = int_to_ptr.hbm [resolvable:$true] %s116
          %s118 = sshll.u32 %s107, 4
          %s119 = int_to_ptr.vmem [resolvable:$true] %s118
          %124 = dma.hbm_to_vmem [thread:$0]  %s117, 1024, %s119, %s104, 256, 128, 8
        $region20: #{tpu_custom_call.1} parent=15 // pred_fallthru
          _
      $region16: #{tpu_custom_call.1} parent=5 // pred_fallthru
        _
      %p125 = scmp.le.s32.totalorder 1, %s13
      %p126 = scmp.lt.s32.totalorder %s13, 3
      %p127 = pnand %p125, %p126
      %p128 = pneg %p127
      // Predicated region
      $region21: #{tpu_custom_call.1} parent=5 // pred_check
        _
      $region22: #{tpu_custom_call.1} parent=5 // pred_check_branch
        %130 = sbr.rel (%p127) target = $region24
      $region23: #{tpu_custom_call.1} parent=5 // pred_region
        %s131 = ssub.s32 %s13, 1
        %s132 = sand.u32 %s40, 1
        %s133 = scalar_lea.sflag [#allocation3], %s132
        %s134 = sand.u32 %s40, 1
        %s135 = smul.addr %s134, 64
        %s136 = scalar_lea.vmem [#allocation2], %s135
        // Predicated region
        $region25: #{tpu_custom_call.1} parent=23 // pred_check
          %p137 = pneg %p53
        $region26: #{tpu_custom_call.1} parent=23 // pred_check_branch
          %139 = sbr.rel (%p137) target = $region28
        $region27: #{tpu_custom_call.1} parent=23 // pred_region
          %141 = dma.done %s133, 1024
        $region28: #{tpu_custom_call.1} parent=23 // pred_fallthru
          _
        %s142 = sand.u32 %s40, 1
        %s143 = scalar_lea.sflag [#allocation3], %s142
        %s144 = sand.u32 %s40, 1
        %s145 = smul.addr %s144, 64
        %s146 = scalar_lea.vmem [#allocation2], %s145
        %p147 = pneg %p53
        %p148 = pneg %p50
        %p149 = pneg %p81
        %p150 = pneg %p78
        %s151 = sand.u32 %s68, 1
        %s152 = scalar_lea.sflag [#allocation4], %s151
        %s153 = sand.u32 %s68, 1
        %s154 = smul.addr %s153, 64
        %s155 = scalar_lea.vmem [#allocation5], %s154
        %s156 = smul.u32 8, %s23
        %s157 = smul.u32 8, %s23
        %v158 = vld [vmem:[%s136] sm:$0xff]
        %v159 = vld [vmem:[%s136 + $0x8] sm:$0xff]
        %v160 = vld [vmem:[%s136 + $0x10] sm:$0xff]
        %v161 = vld [vmem:[%s136 + $0x18] sm:$0xff]
        %v162 = vld [vmem:[%s136 + $0x20] sm:$0xff]
        %v163 = vld [vmem:[%s136 + $0x28] sm:$0xff]
        %v164 = vld [vmem:[%s136 + $0x30] sm:$0xff]
        %v165 = vld [vmem:[%s136 + $0x38] sm:$0xff]
        %174 = vrot.lane.b32.xlu0 %v158, 2
        %v175 = vpop.permute.xlu0 %174
        %176 = vrot.lane.b32.xlu0 %v159, 2
        %v177 = vpop.permute.xlu0 %176
        %178 = vrot.lane.b32.xlu0 %v160, 2
        %v179 = vpop.permute.xlu0 %178
        %180 = vrot.lane.b32.xlu0 %v161, 2
        %v181 = vpop.permute.xlu0 %180
        %182 = vrot.lane.b32.xlu0 %v162, 2
        %v183 = vpop.permute.xlu0 %182
        %184 = vrot.lane.b32.xlu0 %v163, 2
        %v185 = vpop.permute.xlu0 %184
        %186 = vrot.lane.b32.xlu0 %v164, 2
        %v187 = vpop.permute.xlu0 %186
        %188 = vrot.lane.b32.xlu0 %v165, 2
        %v189 = vpop.permute.xlu0 %188
        %vm198 = vcmask 15360
        %v199 = vsel %vm198, 0.0, %v175
        %v200 = vsel %vm198, 0.0, %v177
        %v201 = vsel %vm198, 0.0, %v179
        %v202 = vsel %vm198, 0.0, %v181
        %v203 = vsel %vm198, 0.0, %v183
        %v204 = vsel %vm198, 0.0, %v185
        %v205 = vsel %vm198, 0.0, %v187
        %v206 = vsel %vm198, 0.0, %v189
        %vm207 = vcmask 48128
        %v208 = vsel %vm207, %v199, 0.0
        %v209 = vsel %vm207, %v200, 0.0
        %v210 = vsel %vm207, %v201, 0.0
        %v211 = vsel %vm207, %v202, 0.0
        %v212 = vsel %vm207, %v203, 0.0
        %v213 = vsel %vm207, %v204, 0.0
        %v214 = vsel %vm207, %v205, 0.0
        %v215 = vsel %vm207, %v206, 0.0
        %vm216 = vcmask 64512
        %217 = vst.msk [vmem:[%s155] sm:$0xff] %vm216, %v208
        %218 = vst.msk [vmem:[%s155 + $0x8] sm:$0xff] %vm216, %v209
        %219 = vst.msk [vmem:[%s155 + $0x10] sm:$0xff] %vm216, %v210
        %220 = vst.msk [vmem:[%s155 + $0x18] sm:$0xff] %vm216, %v211
        %221 = vst.msk [vmem:[%s155 + $0x20] sm:$0xff] %vm216, %v212
        %222 = vst.msk [vmem:[%s155 + $0x28] sm:$0xff] %vm216, %v213
        %223 = vst.msk [vmem:[%s155 + $0x30] sm:$0xff] %vm216, %v214
        %224 = vst.msk [vmem:[%s155 + $0x38] sm:$0xff] %vm216, %v215
        %s225 = sand.u32 %s68, 1
        %s226 = scalar_lea.sflag [#allocation4], %s225
        %s227 = sand.u32 %s68, 1
        %s228 = smul.addr %s227, 64
        %s229 = scalar_lea.vmem [#allocation5], %s228
        // Predicated region
        $region29: #{tpu_custom_call.1} parent=23 // pred_check
          %p230 = pneg %p78
        $region30: #{tpu_custom_call.1} parent=23 // pred_check_branch
          %232 = sbr.rel (%p230) target = $region32
        $region31: #{tpu_custom_call.1} parent=23 // pred_region
          %s233 = smul.u32 8, %s23
          %235 = vsyncadd %s226, 0
          %s236 = smul.addr %s22, 8
          %s237 = sadd.s32 %s233, %s236
          %s238 = smul.addr %s237, 8
          %s239 = scalar_lea.hbm %s1, %s238
          %s240 = sshll.u32 %s229, 4
          %s241 = int_to_ptr.vmem [resolvable:$true] %s240
          %s242 = sshll.u32 %s239, 4
          %s243 = int_to_ptr.hbm [resolvable:$true] %s242
          %248 = dma.vmem_to_hbm [thread:$0]  %s241, 1024, %s243, %s226, 128, 128, 8
        $region32: #{tpu_custom_call.1} parent=23 // pred_fallthru
          _
      $region24: #{tpu_custom_call.1} parent=5 // pred_fallthru
        _
      %p249 = scmp.le.s32.totalorder 2, %s13
      // Predicated region
      $region33: #{tpu_custom_call.1} parent=5 // pred_check
        %p250 = pneg %p249
      $region34: #{tpu_custom_call.1} parent=5 // pred_check_branch
        %252 = sbr.rel (%p250) target = $region36
      $region35: #{tpu_custom_call.1} parent=5 // pred_region
        %s253 = ssub.s32 %s13, 2
        // Predicated region
        $region37: #{tpu_custom_call.1} parent=35 // pred_check
          %p254 = pneg %p84
        $region38: #{tpu_custom_call.1} parent=35 // pred_check_branch
          %256 = sbr.rel (%p254) target = $region40
        $region39: #{tpu_custom_call.1} parent=35 // pred_region
          %s257 = sand.u32 %s69, 1
          %s258 = scalar_lea.sflag [#allocation4], %s257
          %s259 = sand.u32 %s69, 1
          %s260 = smul.addr %s259, 64
          %s261 = scalar_lea.vmem [#allocation5], %s260
          %263 = dma.done %s258, 1024
        $region40: #{tpu_custom_call.1} parent=35 // pred_fallthru
          _
      $region36: #{tpu_custom_call.1} parent=5 // pred_fallthru
        _
    $region6: #{tpu_custom_call.1} parent=1 // loop_footer
      %s17 = sadd.s32 1, %s13
    $region7: #{tpu_custom_call.1} parent=1 // loop_footer_branch
      %12 = sbr.rel target = $region3
    $region8: #{tpu_custom_call.1} parent=1 // loop_exit
      _
    %264 = vsyncpa [#allocation3], 1
    %s265 = scalar_lea.sflag [#allocation3], 1
    %266 = vsyncpa %s265, 1
    %267 = vsyncpa [#allocation4], 1
    %s268 = scalar_lea.sflag [#allocation4], 1
    %269 = vsyncpa %s268, 1

</llo_original>
